<compile_context>
chip_gen: v5e
topology: v5e:2x2
jax: 0.10.0
libtpu: 0.0.40
codegen_flags: <defaults>
</compile_context>

<pallas_src>
import functools

import numpy as np
import jax
import jax.numpy as jnp
from jax import lax
from jax.experimental import pallas as pl
from jax.experimental.pallas import tpu as pltpu

EPS = 1e-5


# ----------------------------------------------------------------------------
# Kernel
# ----------------------------------------------------------------------------
def zip_kernel(x_ref, wsq_ref, bsq_ref, wexp_ref, bexp_ref, o_ref, *, H):
    R = x_ref.shape[0]                                   # nb * H rows
    x = x_ref[...]                                       # bf16 (R, W*Cin)

    # squeeze 1x1 (BN scale folded into weight columns) + bias + ReLU
    y = jnp.dot(x, wsq_ref[...], preferred_element_type=jnp.float32)
    y = jnp.maximum(y + bsq_ref[...], 0.0)               # f32 (R, W*Cs)
    y16 = y.astype(jnp.bfloat16)

    # Vertical taps for the 3x3 conv via sublane rolls (XLU) + per-image
    # boundary masks (VPU) -- this work has slack while the MXU is binding.
    # Rolls/masks stay f32 (v5e VPU has no bf16; packed-bf16 sublane roll is
    # awkward); each segment is cast to bf16 BEFORE the lane concat so the
    # concat copies move half the bytes.
    row = lax.broadcasted_iota(jnp.int32, (R, 1), 0)
    y_up = jnp.where(row % H != 0,     pltpu.roll(y, shift=1,     axis=0),
                     0.0).astype(jnp.bfloat16)
    y_dn = jnp.where(row % H != H - 1, pltpu.roll(y, shift=R - 1, axis=0),
                     0.0).astype(jnp.bfloat16)
    y3 = jnp.concatenate([y_up, y16, y_dn], axis=1)      # bf16 (R, 3*W*Cs)

    # ONE fused expand matmul (1x1 weights in the middle-tap rows, banded 3x3
    # weights elsewhere; columns interleaved per pixel Ce1|Ce3 => channel
    # concat is free) + bias + ReLU.
    o = jnp.dot(y3, wexp_ref[...], preferred_element_type=jnp.float32)
    o = jnp.maximum(o + bexp_ref[...], 0.0)
    o_ref[...] = o.astype(o_ref.dtype)


# ----------------------------------------------------------------------------
# Wrappers
# ----------------------------------------------------------------------------
def _pick_images_per_block(N, H, rows_target):
    """Images per grid step: aim for ~rows_target MXU rows per block (amortizes
    MXU fill/drain, weight load and per-step overhead on single-TC v5e/v6e).
    Awkward N is handled by zero-padding in the caller, not by shrinking nb."""
    return max(1, min(N, max(1, rows_target // max(H, 1))))


def zip_layer_forward_rowflat(x_rows, packed, *, img_rows,
                              out_dtype=jnp.float32, rows_target=512):
    """Row-flattened-NHWC entry point (use this between layers so the
    NCHW<->NHWC transposes only happen at the network boundary).

    x_rows: (N*H, W*Cin); returns (N*H, W*(Ce1+Ce3)) in `out_dtype`
    (pass out_dtype=jnp.bfloat16 when the next layer consumes bf16 to halve
    output HBM/store traffic)."""
    wsq, bsq, wexp, bexp = packed
    H = img_rows
    x_rows = x_rows.astype(jnp.bfloat16)
    R_total, WCin = x_rows.shape
    N = R_total // H
    WCpk = wexp.shape[1]

    nb = _pick_images_per_block(N, H, rows_target)
    n_pad = (-N) % nb
    if n_pad:                                   # pad batch instead of nb -> 1
        x_rows = jnp.pad(x_rows, ((0, n_pad * H), (0, 0)))
    Np = N + n_pad
    R = nb * H                                  # rows per grid step

    def full(a):
        # Whole-array block with a constant block index: the pipeline detects
        # the unchanged index across grid steps and does not re-DMA weights.
        # NOTE: at realistic fire-layer sizes the O(W^2*C) slabs should be
        # single-buffered (pipeline_mode=pl.Buffered(1)) or W-tiled with an
        # extra grid axis so they fit v7x's 64 MiB per-TC VMEM.
        return pl.BlockSpec(a.shape, lambda g: (0,) * a.ndim)

    o = pl.pallas_call(
        functools.partial(zip_kernel, H=H),
        out_shape=jax.ShapeDtypeStruct((Np * H, WCpk), out_dtype),
        grid=(Np // nb,),
        in_specs=[
            pl.BlockSpec((R, WCin), lambda g: (g, 0)),
            full(wsq), full(bsq), full(wexp), full(bexp),
        ],
        out_specs=pl.BlockSpec((R, WCpk), lambda g: (g, 0)),
        compiler_params=pltpu.CompilerParams(
            dimension_semantics=("parallel",),
            vmem_limit_bytes=32 * 1024 * 1024),
    )(x_rows, wsq, bsq, wexp, bexp)

    if n_pad:
        o = o[: N * H]
    return o


def zip_layer_forward(x_nchw, packed):
    """NCHW boundary wrapper (matches the PyTorch module interface).  In a full
    network keep the row-flattened layout and call zip_layer_forward_rowflat
    directly; the transposes here are module-boundary glue only."""
    N, Cin, H, W = x_nchw.shape
    WCpk = packed[2].shape[1]
    Cpk = WCpk // W
    x_rows = (jnp.transpose(x_nchw, (0, 2, 3, 1))
              .astype(jnp.bfloat16).reshape(N * H, W * Cin))
    o_rows = zip_layer_forward_rowflat(x_rows, packed, img_rows=H,
                                       out_dtype=jnp.float32)
    out = o_rows.reshape(N, H, W, Cpk)          # channels already (Ce1|Ce3)
    return jnp.transpose(out, (0, 3, 1, 2))     # back to NCHW


# ----------------------------------------------------------------------------
# Parameters: init, BN folding, packing
# ----------------------------------------------------------------------------
def init_raw_params(key, in_channels, squeeze_channels, e1x1_channels, e3x3_channels):
    ks = jax.random.split(key, 6)

    def conv_w(k, shape, fan_in):
        return jax.random.normal(k, shape, jnp.float32) / np.sqrt(fan_in)

    w_sq = conv_w(ks[0], (1, 1, in_channels, squeeze_channels), in_channels)          # HWIO
    b_sq = 0.05 * jax.random.normal(ks[1], (squeeze_channels,), jnp.float32)
    w_e1 = conv_w(ks[2], (1, 1, squeeze_channels, e1x1_channels), squeeze_channels)
    b_e1 = 0.05 * jax.random.normal(ks[3], (e1x1_channels,), jnp.float32)
    w_e3 = conv_w(ks[4], (3, 3, squeeze_channels, e3x3_channels), 9 * squeeze_channels)
    b_e3 = 0.05 * jax.random.normal(ks[5], (e3x3_channels,), jnp.float32)
    return dict(w_sq=w_sq, b_sq=b_sq, w_e1=w_e1, b_e1=b_e1, w_e3=w_e3, b_e3=b_e3)


def fold_bn(raw):
    """Eval-mode BN (default running stats) folded into the convs.
    Returns bf16 HWIO weights (scale folded into output channels) + f32 biases."""
    def fold(w_hwio, conv_b):
        c = conv_b.shape[0]
        gamma = jnp.ones((c,), jnp.float32)
        beta = jnp.zeros((c,), jnp.float32)
        mean = jnp.zeros((c,), jnp.float32)
        var = jnp.ones((c,), jnp.float32)
        scale = gamma / jnp.sqrt(var + EPS)
        w = (w_hwio * scale).astype(jnp.bfloat16)     # scale -> weight columns
        b = beta + (conv_b - mean) * scale            # bias stays f32
        return w, b

    w_sq, b_sq = fold(raw["w_sq"], raw["b_sq"])
    w_e1, b_e1 = fold(raw["w_e1"], raw["b_e1"])
    w_e3, b_e3 = fold(raw["w_e3"], raw["b_e3"])
    return dict(w_sq=w_sq, b_sq=b_sq, w_e1=w_e1, b_e1=b_e1, w_e3=w_e3, b_e3=b_e3)


def pack_params(folded, W):
    # Cast bf16 -> f32 (exact), build the slabs in f32 with 0/1 placement only,
    # cast back to bf16 (exact round trip) so the kernel sees bit-identical
    # weight values to the lax.conv reference.
    w_sq = np.asarray(folded["w_sq"].astype(jnp.float32))[0, 0]     # (Cin, Cs)
    w_e1 = np.asarray(folded["w_e1"].astype(jnp.float32))[0, 0]     # (Cs, Ce1)
    w_e3 = np.asarray(folded["w_e3"].astype(jnp.float32))           # (3, 3, Cs, Ce3)
    Cin, Cs = w_sq.shape
    Ce1 = w_e1.shape[1]
    Ce3 = w_e3.shape[3]
    Cpk = Ce1 + Ce3

    eyeW = np.eye(W, dtype=np.float32)
    wsq_bd = np.kron(eyeW, w_sq)                                    # (W*Cin, W*Cs)

    # Combined expand slab: vertical taps stacked along K (rows
    # [t*W*Cs:(t+1)*W*Cs] = tap t; tap 0 pairs with y_up, 1 with y, 2 with
    # y_dn).  Output columns interleaved per pixel: [Ce1 | Ce3].  The 1x1
    # expand weights live only in the middle tap / center pixel; horizontal
    # 3x3 taps and W-boundary zeros are baked into the Ce3 bands.
    wexp = np.zeros((3, W * Cs, W * Cpk), np.float32)
    for j_out in range(W):
        c0 = j_out * Cpk
        wexp[1, j_out * Cs:(j_out + 1) * Cs, c0:c0 + Ce1] = w_e1    # expand 1x1
        for t in range(3):                  # vertical tap (ky)
            for dx in range(3):             # horizontal tap (kx)
                j_in = j_out + dx - 1
                if 0 <= j_in < W:
                    wexp[t,
                         j_in * Cs:(j_in + 1) * Cs,
                         c0 + Ce1:c0 + Cpk] = w_e3[t, dx]           # expand 3x3
    wexp = wexp.reshape(3 * W * Cs, W * Cpk)

    b_sq = np.tile(np.asarray(folded["b_sq"], np.float32), W)[None, :]
    b_exp = np.tile(np.concatenate([np.asarray(folded["b_e1"], np.float32),
                                    np.asarray(folded["b_e3"], np.float32)]),
                    W)[None, :]

    # NOTE: the block-diagonal/banded slabs are O(W^2 * C_in * C_out) bytes;
    # for large W, tile W with an extra grid axis (band-restricted index_maps)
    # or single-buffer them so they stay resident in v7x's 64 MiB VMEM.
    return (jnp.asarray(wsq_bd, jnp.bfloat16), jnp.asarray(b_sq, jnp.float32),
            jnp.asarray(wexp, jnp.bfloat16),   jnp.asarray(b_exp, jnp.float32))


# ----------------------------------------------------------------------------
# Reference (same bf16 operands, f32 accumulation, via lax.conv in NHWC)
# ----------------------------------------------------------------------------
def reference_nchw(x_nchw, folded):
    x = jnp.transpose(x_nchw, (0, 2, 3, 1)).astype(jnp.bfloat16)

    def conv(h, w, pad):
        return lax.conv_general_dilated(
            h, w, window_strides=(1, 1), padding=pad,
            dimension_numbers=("NHWC", "HWIO", "NHWC"),
            preferred_element_type=jnp.float32,
            precision=lax.Precision.HIGHEST)

    y = jnp.maximum(conv(x, folded["w_sq"], "VALID") + folded["b_sq"], 0.0)
    y = y.astype(jnp.bfloat16)
    o1 = jnp.maximum(conv(y, folded["w_e1"], "VALID") + folded["b_e1"], 0.0)
    o3 = jnp.maximum(conv(y, folded["w_e3"], ((1, 1), (1, 1))) + folded["b_e3"], 0.0)
    out = jnp.concatenate([o1, o3], axis=-1)
    return jnp.transpose(out, (0, 3, 1, 2))


if __name__ == "__main__":
    key = jax.random.PRNGKey(0)
    kx, kp = jax.random.split(key)

    # ZipLayer(in_channels=8, squeeze_channels=4, e1x1_channels=8, e3x3_channels=8)
    N, Cin, H, W = 4, 8, 16, 16
    Cs, Ce1, Ce3 = 4, 8, 8

    x = jax.random.normal(kx, (N, Cin, H, W), jnp.float32)   # NCHW, like PyTorch
    raw = init_raw_params(kp, Cin, Cs, Ce1, Ce3)
    folded = fold_bn(raw)
    packed = pack_params(folded, W)

    out = jax.block_until_ready(zip_layer_forward(x, packed))
    assert out.shape == (N, Ce1 + Ce3, H, W), out.shape

    # The reference uses the exact same bf16 operands and f32 accumulation, so
    # layout/packing bugs would show up as O(1) errors.  The residual tolerance
    # covers f32 reassociation (the fused expand matmul only adds exact zeros,
    # but the summation order differs) plus the worst case of a single 1-ulp
    # flip on the bf16-rounded intermediate y multiplied by the largest expand
    # weight (~1.3) -> ~2e-2 absolute.
    ref = jax.block_until_ready(reference_nchw(x, folded))
    np.testing.assert_allclose(np.asarray(out), np.asarray(ref),
                               rtol=1e-2, atol=2e-2)
    print("KERNEL_OK")
</pallas_src>

<mosaic_0001>
module attributes {stable_mosaic.version = 11 : i64} {
  func.func @zip_kernel(%arg0: i32, %arg1: memref<64x128xbf16, #tpu.memory_space<vmem>>, %arg2: memref<128x64xbf16, #tpu.memory_space<vmem>>, %arg3: memref<1x64xf32, #tpu.memory_space<vmem>>, %arg4: memref<192x256xbf16, #tpu.memory_space<vmem>>, %arg5: memref<1x256xf32, #tpu.memory_space<vmem>>, %arg6: memref<64x256xf32, #tpu.memory_space<vmem>>) attributes {dimension_semantics = [#tpu.dimension_semantics<parallel>], iteration_bounds = array<i64: 1>, scalar_prefetch = 0 : i64, scratch_operands = 0 : i64, tpu.core_type = #tpu.core_type<tc>, window_params = [{transform_indices = @transform_0, window_bounds = array<i64: 64, 128>}, {pipeline_mode = #tpu.pipeline_mode<synchronous>, transform_indices = @transform_1, window_bounds = array<i64: 128, 64>}, {pipeline_mode = #tpu.pipeline_mode<synchronous>, transform_indices = @transform_2, window_bounds = array<i64: 1, 64>}, {pipeline_mode = #tpu.pipeline_mode<synchronous>, transform_indices = @transform_3, window_bounds = array<i64: 192, 256>}, {pipeline_mode = #tpu.pipeline_mode<synchronous>, transform_indices = @transform_4, window_bounds = array<i64: 1, 256>}, {transform_indices = @transform_5, window_bounds = array<i64: 64, 256>}]} {
    %c0 = arith.constant 0 : index
    %c0_0 = arith.constant 0 : index
    %0 = vector.load %arg1[%c0, %c0_0] : memref<64x128xbf16, #tpu.memory_space<vmem>>, vector<64x128xbf16>
    %c0_1 = arith.constant 0 : index
    %c0_2 = arith.constant 0 : index
    %1 = vector.load %arg2[%c0_1, %c0_2] : memref<128x64xbf16, #tpu.memory_space<vmem>>, vector<128x64xbf16>
    %cst = arith.constant dense<0.000000e+00> : vector<64x64xf32>
    %2 = tpu.matmul %0, %1, %cst {dimension_numbers = #tpu.dot_dimension_numbers<[1], [0], [0], [1], [0, 0, 1, 1], [], []>} : vector<64x128xbf16>, vector<128x64xbf16>, vector<64x64xf32> -> vector<64x64xf32>
    %c0_3 = arith.constant 0 : index
    %c0_4 = arith.constant 0 : index
    %3 = vector.load %arg3[%c0_3, %c0_4] : memref<1x64xf32, #tpu.memory_space<vmem>>, vector<1x64xf32>
    %4 = vector.broadcast %3 : vector<1x64xf32> to vector<64x64xf32>
    %5 = arith.addf %2, %4 : vector<64x64xf32>
    %cst_5 = arith.constant 0.000000e+00 : f32
    %6 = vector.broadcast %cst_5 : f32 to vector<64x64xf32>
    %7 = arith.maximumf %5, %6 : vector<64x64xf32>
    %8 = arith.truncf %7 : vector<64x64xf32> to vector<64x64xbf16>
    %9 = tpu.iota {dimensions = array<i32: 0>} : vector<64x1xi32>
    %c16_i32 = arith.constant 16 : i32
    %c0_i32 = arith.constant 0 : i32
    %10 = arith.cmpi eq, %c16_i32, %c0_i32 : i32
    %c1_i32 = arith.constant 1 : i32
    %11 = arith.select %10, %c1_i32, %c16_i32 : i32
    %12 = vector.broadcast %11 : i32 to vector<64x1xi32>
    %13 = arith.remsi %9, %12 : vector<64x1xi32>
    %c0_i32_6 = arith.constant 0 : i32
    %14 = vector.broadcast %c0_i32_6 : i32 to vector<64x1xi32>
    %15 = arith.cmpi ne, %13, %14 : vector<64x1xi32>
    %c0_i32_7 = arith.constant 0 : i32
    %16 = vector.broadcast %c0_i32_7 : i32 to vector<64x1xi32>
    %17 = arith.cmpi slt, %13, %16 : vector<64x1xi32>
    %c0_i32_8 = arith.constant 0 : i32
    %18 = arith.cmpi slt, %11, %c0_i32_8 : i32
    %19 = vector.broadcast %18 : i1 to vector<64x1xi1>
    %20 = vector.broadcast %19 : vector<64x1xi1> to vector<64x1xi1>
    %21 = arith.xori %17, %20 : vector<64x1xi1>
    %22 = arith.andi %21, %15 : vector<64x1xi1>
    %23 = vector.broadcast %11 : i32 to vector<64x1xi32>
    %24 = arith.addi %13, %23 : vector<64x1xi32>
    %25 = arith.select %22, %24, %13 : vector<64x1xi1>, vector<64x1xi32>
    %c0_i32_9 = arith.constant 0 : i32
    %26 = vector.broadcast %c0_i32_9 : i32 to vector<64x1xi32>
    %27 = arith.cmpi ne, %25, %26 : vector<64x1xi32>
    %c1_i32_10 = arith.constant 1 : i32
    %28 = tpu.dynamic_rotate %7 by %c1_i32_10 dim 0 : vector<64x64xf32>, i32 -> vector<64x64xf32>
    %cst_11 = arith.constant 0.000000e+00 : f32
    %29 = vector.shape_cast %27 : vector<64x1xi1> to vector<64x1xi1>
    %30 = vector.broadcast %29 : vector<64x1xi1> to vector<64x64xi1>
    %31 = vector.broadcast %cst_11 : f32 to vector<64x64xf32>
    %32 = arith.select %30, %28, %31 : vector<64x64xi1>, vector<64x64xf32>
    %33 = arith.truncf %32 : vector<64x64xf32> to vector<64x64xbf16>
    %c16_i32_12 = arith.constant 16 : i32
    %c0_i32_13 = arith.constant 0 : i32
    %34 = arith.cmpi eq, %c16_i32_12, %c0_i32_13 : i32
    %c1_i32_14 = arith.constant 1 : i32
    %35 = arith.select %34, %c1_i32_14, %c16_i32_12 : i32
    %36 = vector.broadcast %35 : i32 to vector<64x1xi32>
    %37 = arith.remsi %9, %36 : vector<64x1xi32>
    %c0_i32_15 = arith.constant 0 : i32
    %38 = vector.broadcast %c0_i32_15 : i32 to vector<64x1xi32>
    %39 = arith.cmpi ne, %37, %38 : vector<64x1xi32>
    %c0_i32_16 = arith.constant 0 : i32
    %40 = vector.broadcast %c0_i32_16 : i32 to vector<64x1xi32>
    %41 = arith.cmpi slt, %37, %40 : vector<64x1xi32>
    %c0_i32_17 = arith.constant 0 : i32
    %42 = arith.cmpi slt, %35, %c0_i32_17 : i32
    %43 = vector.broadcast %42 : i1 to vector<64x1xi1>
    %44 = vector.broadcast %43 : vector<64x1xi1> to vector<64x1xi1>
    %45 = arith.xori %41, %44 : vector<64x1xi1>
    %46 = arith.andi %45, %39 : vector<64x1xi1>
    %47 = vector.broadcast %35 : i32 to vector<64x1xi32>
    %48 = arith.addi %37, %47 : vector<64x1xi32>
    %49 = arith.select %46, %48, %37 : vector<64x1xi1>, vector<64x1xi32>
    %c15_i32 = arith.constant 15 : i32
    %50 = vector.broadcast %c15_i32 : i32 to vector<64x1xi32>
    %51 = arith.cmpi ne, %49, %50 : vector<64x1xi32>
    %c63_i32 = arith.constant 63 : i32
    %52 = tpu.dynamic_rotate %7 by %c63_i32 dim 0 : vector<64x64xf32>, i32 -> vector<64x64xf32>
    %cst_18 = arith.constant 0.000000e+00 : f32
    %53 = vector.shape_cast %51 : vector<64x1xi1> to vector<64x1xi1>
    %54 = vector.broadcast %53 : vector<64x1xi1> to vector<64x64xi1>
    %55 = vector.broadcast %cst_18 : f32 to vector<64x64xf32>
    %56 = arith.select %54, %52, %55 : vector<64x64xi1>, vector<64x64xf32>
    %57 = arith.truncf %56 : vector<64x64xf32> to vector<64x64xbf16>
    %58 = tpu.concatenate %33, %8, %57 in 1 : vector<64x64xbf16>, vector<64x64xbf16>, vector<64x64xbf16> -> vector<64x192xbf16>
    %c0_19 = arith.constant 0 : index
    %c0_20 = arith.constant 0 : index
    %59 = vector.load %arg4[%c0_19, %c0_20] : memref<192x256xbf16, #tpu.memory_space<vmem>>, vector<192x256xbf16>
    %cst_21 = arith.constant dense<0.000000e+00> : vector<64x256xf32>
    %60 = tpu.matmul %58, %59, %cst_21 {dimension_numbers = #tpu.dot_dimension_numbers<[1], [0], [0], [1], [0, 0, 1, 1], [], []>} : vector<64x192xbf16>, vector<192x256xbf16>, vector<64x256xf32> -> vector<64x256xf32>
    %c0_22 = arith.constant 0 : index
    %c0_23 = arith.constant 0 : index
    %61 = vector.load %arg5[%c0_22, %c0_23] : memref<1x256xf32, #tpu.memory_space<vmem>>, vector<1x256xf32>
    %62 = vector.broadcast %61 : vector<1x256xf32> to vector<64x256xf32>
    %63 = arith.addf %60, %62 : vector<64x256xf32>
    %cst_24 = arith.constant 0.000000e+00 : f32
    %64 = vector.broadcast %cst_24 : f32 to vector<64x256xf32>
    %65 = arith.maximumf %63, %64 : vector<64x256xf32>
    %c0_25 = arith.constant 0 : index
    %c0_26 = arith.constant 0 : index
    %66 = vector.load %arg6[%c0_25, %c0_26] : memref<64x256xf32, #tpu.memory_space<vmem>>, vector<64x256xf32>
    tpu.vector_store %arg6[%c0_25, %c0_26], %65 {strides = array<i32>} : memref<64x256xf32, #tpu.memory_space<vmem>>, vector<64x256xf32>,
    return
  }
  func.func @transform_0(%arg0: i32) -> (i32, i32) {
    %c0_i32 = arith.constant 0 : i32
    %c0_i32_0 = arith.constant 0 : i32
    return %arg0, %c0_i32 : i32, i32
  }
  func.func @transform_1(%arg0: i32) -> (i32, i32) {
    %c0_i32 = arith.constant 0 : i32
    %c0_i32_0 = arith.constant 0 : i32
    %c0_i32_1 = arith.constant 0 : i32
    return %c0_i32, %c0_i32_0 : i32, i32
  }
  func.func @transform_2(%arg0: i32) -> (i32, i32) {
    %c0_i32 = arith.constant 0 : i32
    %c0_i32_0 = arith.constant 0 : i32
    %c0_i32_1 = arith.constant 0 : i32
    return %c0_i32, %c0_i32_0 : i32, i32
  }
  func.func @transform_3(%arg0: i32) -> (i32, i32) {
    %c0_i32 = arith.constant 0 : i32
    %c0_i32_0 = arith.constant 0 : i32
    %c0_i32_1 = arith.constant 0 : i32
    return %c0_i32, %c0_i32_0 : i32, i32
  }
  func.func @transform_4(%arg0: i32) -> (i32, i32) {
    %c0_i32 = arith.constant 0 : i32
    %c0_i32_0 = arith.constant 0 : i32
    %c0_i32_1 = arith.constant 0 : i32
    return %c0_i32, %c0_i32_0 : i32, i32
  }
  func.func @transform_5(%arg0: i32) -> (i32, i32) {
    %c0_i32 = arith.constant 0 : i32
    %c0_i32_0 = arith.constant 0 : i32
    return %arg0, %c0_i32 : i32, i32
  }
}

</mosaic_0001>

<llo_original>
// kernel: tpu_custom_call.1
$region0: #{tpu_custom_call.1}
  #allocation0 [shape = 'u32[]', space=smem, size = 0x4, offset = 0x4, fixed_abs, tag = 'smem constant byte address 0x4 - core index']
  #allocation1 [shape = 'u32[72,128]{1,0:T(1,128)}', space=vmem, size = 0x9000, scoped, tag = 'internal scratch']
  %s0 = inlined_call_operand.vmem [shape: bf16[64,128], index: 0, kind: input, shape index: {}]
  %s1 = inlined_call_operand.vmem [shape: bf16[128,64], index: 1, kind: input, shape index: {}]
  %s2 = inlined_call_operand.vmem [shape: f32[1,64], index: 2, kind: input, shape index: {}]
  %s3 = inlined_call_operand.hbm [shape: bf16[192,256], index: 3, kind: input, shape index: {}]
  %s4 = inlined_call_operand.vmem [shape: f32[1,256], index: 4, kind: input, shape index: {}]
  %s5 = inlined_call_operand.hbm [shape: f32[64,256], index: 5, kind: output, shape index: {}]
  %s6 = sld [smem:[#allocation0]]
  $region34: #{tpu_custom_call.1} parent=0
    _
  %s8 = ssub.s32 1, %s6
  %s9 = scalar_select 0, %s8, %s6
  $region1: #{tpu_custom_call.1} parent=0
    #allocation2 [shape = 'u8[98304]{0}', space=vmem, size = 0x18000, scoped, tag = 'input window, operand 3, single buffered']
    #allocation3 [shape = 's32[1]{0}', space=sflag, size = 0x4, scoped, tag = 'scoped memory for tpu_custom_call.1']
    #allocation4 [shape = 's32[1]{0}', space=sflag, size = 0x4, scoped, tag = 'scoped memory for tpu_custom_call.1']
    #allocation5 [shape = 'u8[65536]{0}', space=vmem, size = 0x10000, scoped, tag = 'output window, operand 0, single buffered']
    %10 = vsyncpa [#allocation3], 0
    %11 = vsyncpa [#allocation4], 0
    // Predicated region
    $region2: #{tpu_custom_call.1} parent=1 // pred_check
      _
    $region3: #{tpu_custom_call.1} parent=1 // pred_check_branch
      %13 = sbr.rel (0) target = $region5
    $region4: #{tpu_custom_call.1} parent=1 // pred_region
      _
    $region5: #{tpu_custom_call.1} parent=1 // pred_fallthru
      _
    // Predicated region
    $region6: #{tpu_custom_call.1} parent=1 // pred_check
      _
    $region7: #{tpu_custom_call.1} parent=1 // pred_check_branch
      %15 = sbr.rel (0) target = $region9
    $region8: #{tpu_custom_call.1} parent=1 // pred_region
      _
    $region9: #{tpu_custom_call.1} parent=1 // pred_fallthru
      _
    // Predicated region
    $region10: #{tpu_custom_call.1} parent=1 // pred_check
      _
    $region11: #{tpu_custom_call.1} parent=1 // pred_check_branch
      %17 = sbr.rel (0) target = $region13
    $region12: #{tpu_custom_call.1} parent=1 // pred_region
      _
    $region13: #{tpu_custom_call.1} parent=1 // pred_fallthru
      _
    // Predicated region
    $region14: #{tpu_custom_call.1} parent=1 // pred_check
      _
    $region15: #{tpu_custom_call.1} parent=1 // pred_check_branch
      %19 = sbr.rel (0) target = $region17
    $region16: #{tpu_custom_call.1} parent=1 // pred_region
      %21 = vsyncadd [#allocation3], 0
      %s22 = sshll.u32 %s3, 4
      %s23 = int_to_ptr.hbm [resolvable:$true] %s22
      %s24 = sshll.u32 [#allocation2], 4
      %s25 = int_to_ptr.vmem [resolvable:$true] %s24
      %30 = dma.hbm_to_vmem [thread:$0]  %s23, 3072, %s25, [#allocation3], 128, 128, 8
    $region17: #{tpu_custom_call.1} parent=1 // pred_fallthru
      _
    // Predicated region
    $region18: #{tpu_custom_call.1} parent=1 // pred_check
      _
    $region19: #{tpu_custom_call.1} parent=1 // pred_check_branch
      %32 = sbr.rel (0) target = $region21
    $region20: #{tpu_custom_call.1} parent=1 // pred_region
      _
    $region21: #{tpu_custom_call.1} parent=1 // pred_fallthru
      _
    // Predicated region
    $region22: #{tpu_custom_call.1} parent=1 // pred_check
      _
    $region23: #{tpu_custom_call.1} parent=1 // pred_check_branch
      %34 = sbr.rel (0) target = $region25
    $region24: #{tpu_custom_call.1} parent=1 // pred_region
      %36 = dma.done [#allocation3], 3072
    $region25: #{tpu_custom_call.1} parent=1 // pred_fallthru
      _
    %v38 = vld [vmem:[%s0] sm:$0xf]
    %v39 = vld [vmem:[%s0 + $0x4] sm:$0xf]
    %v40 = vld [vmem:[%s0 + $0x8] sm:$0xf]
    %v41 = vld [vmem:[%s0 + $0xc] sm:$0xf]
    %v42 = vld [vmem:[%s0 + $0x10] sm:$0xf]
    %v43 = vld [vmem:[%s0 + $0x14] sm:$0xf]
    %v44 = vld [vmem:[%s0 + $0x18] sm:$0xf]
    %v45 = vld [vmem:[%s0 + $0x1c] sm:$0xf]
    %v46 = vld [vmem:[%s1] sm:$0xf]
    %v47 = vld [vmem:[%s1 + $0x4] sm:$0xf]
    %v48 = vld [vmem:[%s1 + $0x8] sm:$0xf]
    %v49 = vld [vmem:[%s1 + $0xc] sm:$0xf]
    %v50 = vld [vmem:[%s1 + $0x10] sm:$0xf]
    %v51 = vld [vmem:[%s1 + $0x14] sm:$0xf]
    %v52 = vld [vmem:[%s1 + $0x18] sm:$0xf]
    %v53 = vld [vmem:[%s1 + $0x1c] sm:$0xf]
    %v54 = vld [vmem:[%s1 + $0x20] sm:$0xf]
    %v55 = vld [vmem:[%s1 + $0x24] sm:$0xf]
    %v56 = vld [vmem:[%s1 + $0x28] sm:$0xf]
    %v57 = vld [vmem:[%s1 + $0x2c] sm:$0xf]
    %v58 = vld [vmem:[%s1 + $0x30] sm:$0xf]
    %v59 = vld [vmem:[%s1 + $0x34] sm:$0xf]
    %v60 = vld [vmem:[%s1 + $0x38] sm:$0xf]
    %v61 = vld [vmem:[%s1 + $0x3c] sm:$0xf]
    %v62 = vld [vmem:[%s2] sm:$0x1]
    %v64 = vperm.slane %v62, 0
    %v74 = vunpack.c.l.b16 %v38
    %v75 = vunpack.c.l.b16 %v39
    %v76 = vunpack.c.l.b16 %v40
    %v77 = vunpack.c.l.b16 %v41
    %v78 = vunpack.c.l.b16 %v42
    %v79 = vunpack.c.l.b16 %v43
    %v80 = vunpack.c.l.b16 %v44
    %v81 = vunpack.c.l.b16 %v45
    %v82 = vpack.c.b16 %v75, %v74
    %v83 = vpack.c.b16 %v77, %v76
    %v84 = vpack.c.b16 %v79, %v78
    %v85 = vpack.c.b16 %v81, %v80
    %v106 = vunpack.c.l.b16 %v46
    %v107 = vunpack.c.l.b16 %v47
    %v108 = vunpack.c.l.b16 %v48
    %v109 = vunpack.c.l.b16 %v49
    %v110 = vunpack.c.l.b16 %v50
    %v111 = vunpack.c.l.b16 %v51
    %v112 = vunpack.c.l.b16 %v52
    %v113 = vunpack.c.l.b16 %v53
    %v114 = vunpack.c.l.b16 %v54
    %v115 = vunpack.c.l.b16 %v55
    %v116 = vunpack.c.l.b16 %v56
    %v117 = vunpack.c.l.b16 %v57
    %v118 = vunpack.c.l.b16 %v58
    %v119 = vunpack.c.l.b16 %v59
    %v120 = vunpack.c.l.b16 %v60
    %v121 = vunpack.c.l.b16 %v61
    %v122 = vpack.c.b16 %v107, %v106
    %v123 = vpack.c.b16 %v109, %v108
    %v124 = vpack.c.b16 %v111, %v110
    %v125 = vpack.c.b16 %v113, %v112
    %v126 = vpack.c.b16 %v115, %v114
    %v127 = vpack.c.b16 %v117, %v116
    %v128 = vpack.c.b16 %v119, %v118
    %v129 = vpack.c.b16 %v121, %v120
    %138 = vmatpush.bf16.msra.mxu0 %v129
    %139 = vmatpush.bf16.msra.mxu0 %v128
    %140 = vmatpush.bf16.msra.mxu0 %v127
    %141 = vmatpush.bf16.msra.mxu0 %v126
    %142 = vmatpush.bf16.msra.mxu0 %v125
    %143 = vmatpush.bf16.msra.mxu0 %v124
    %144 = vmatpush.bf16.msra.mxu0 %v123
    %145 = vmatpush.bf16.msra.mxu0 %v122
    %146 = vmatmul.bf16.gmra.mxu0 %v82
    %v147 = vpop.f32.mrf.mxu0
    %v148 = vadd.f32 %v64, %v147
    %v149 = vpop.f32.mrf.mxu0
    %v150 = vadd.f32 %v64, %v149
    %151 = vmatmul.bf16.gmra.mxu0 %v83
    %v152 = vpop.f32.mrf.mxu0
    %v153 = vadd.f32 %v64, %v152
    %v154 = vpop.f32.mrf.mxu0
    %v155 = vadd.f32 %v64, %v154
    %156 = vmatmul.bf16.gmra.mxu0 %v84
    %v157 = vpop.f32.mrf.mxu0
    %v158 = vadd.f32 %v64, %v157
    %v159 = vpop.f32.mrf.mxu0
    %v160 = vadd.f32 %v64, %v159
    %161 = vmatmul.bf16.gmra.mxu0 %v85
    %v162 = vpop.f32.mrf.mxu0
    %v163 = vadd.f32 %v64, %v162
    %v164 = vpop.f32.mrf.mxu0
    %v165 = vadd.f32 %v64, %v164
    %166 = vdwg.mxu0
    %v167 = vmax.f32 %v148, 0.0
    %v168 = vmax.f32 %v150, 0.0
    %v169 = vmax.f32 %v153, 0.0
    %v170 = vmax.f32 %v155, 0.0
    %v171 = vmax.f32 %v158, 0.0
    %v172 = vmax.f32 %v160, 0.0
    %v173 = vmax.f32 %v163, 0.0
    %v174 = vmax.f32 %v165, 0.0
    %v175 = vpack.c.bf16 %v167, %v167
    %v176 = vpack.c.bf16 %v168, %v168
    %v177 = vpack.c.bf16 %v169, %v169
    %v178 = vpack.c.bf16 %v170, %v170
    %v179 = vpack.c.bf16 %v171, %v171
    %v180 = vpack.c.bf16 %v172, %v172
    %v181 = vpack.c.bf16 %v173, %v173
    %v182 = vpack.c.bf16 %v174, %v174
    %v183 = vlaneseq
    %v184 = vshrl.u32 %v183, 7
    %v185 = vadd.s32 %v184, 8
    %v186 = vadd.s32 %v184, 16
    %v187 = vadd.s32 %v184, 24
    %v188 = vadd.s32 %v184, 32
    %v189 = vadd.s32 %v184, 40
    %v190 = vadd.s32 %v184, 48
    %v191 = vadd.s32 %v184, 56
    %vm192 = vcmp.lt.s32.totalorder %v184, 0
    %v193 = vsub.s32 0, %v184
    %v194 = vsel %vm192, %v193, %v184
    %v195 = vshrl.u32 %v194, 4
    %v196 = vand.u32 %v194, 15
    %v197 = vsub.s32 0, %v196
    %v198 = vsel %vm192, %v197, %v196
    %vm199 = vcmp.lt.s32.totalorder %v185, 0
    %v200 = vsub.s32 0, %v185
    %v201 = vsel %vm199, %v200, %v185
    %v202 = vshrl.u32 %v201, 4
    %v203 = vand.u32 %v201, 15
    %v204 = vsub.s32 0, %v203
    %v205 = vsel %vm199, %v204, %v203
    %vm206 = vcmp.lt.s32.totalorder %v186, 0
    %v207 = vsub.s32 0, %v186
    %v208 = vsel %vm206, %v207, %v186
    %v209 = vshrl.u32 %v208, 4
    %v210 = vand.u32 %v208, 15
    %v211 = vsub.s32 0, %v210
    %v212 = vsel %vm206, %v211, %v210
    %vm213 = vcmp.lt.s32.totalorder %v187, 0
    %v214 = vsub.s32 0, %v187
    %v215 = vsel %vm213, %v214, %v187
    %v216 = vshrl.u32 %v215, 4
    %v217 = vand.u32 %v215, 15
    %v218 = vsub.s32 0, %v217
    %v219 = vsel %vm213, %v218, %v217
    %vm220 = vcmp.lt.s32.totalorder %v188, 0
    %v221 = vsub.s32 0, %v188
    %v222 = vsel %vm220, %v221, %v188
    %v223 = vshrl.u32 %v222, 4
    %v224 = vand.u32 %v222, 15
    %v225 = vsub.s32 0, %v224
    %v226 = vsel %vm220, %v225, %v224
    %vm227 = vcmp.lt.s32.totalorder %v189, 0
    %v228 = vsub.s32 0, %v189
    %v229 = vsel %vm227, %v228, %v189
    %v230 = vshrl.u32 %v229, 4
    %v231 = vand.u32 %v229, 15
    %v232 = vsub.s32 0, %v231
    %v233 = vsel %vm227, %v232, %v231
    %vm234 = vcmp.lt.s32.totalorder %v190, 0
    %v235 = vsub.s32 0, %v190
    %v236 = vsel %vm234, %v235, %v190
    %v237 = vshrl.u32 %v236, 4
    %v238 = vand.u32 %v236, 15
    %v239 = vsub.s32 0, %v238
    %v240 = vsel %vm234, %v239, %v238
    %vm241 = vcmp.lt.s32.totalorder %v191, 0
    %v242 = vsub.s32 0, %v191
    %v243 = vsel %vm241, %v242, %v191
    %v244 = vshrl.u32 %v243, 4
    %v245 = vand.u32 %v243, 15
    %v246 = vsub.s32 0, %v245
    %v247 = vsel %vm241, %v246, %v245
    %vm248 = vcmp.ne.s32.totalorder %v198, 0
    %vm249 = vcmp.ne.s32.totalorder %v205, 0
    %vm250 = vcmp.ne.s32.totalorder %v212, 0
    %vm251 = vcmp.ne.s32.totalorder %v219, 0
    %vm252 = vcmp.ne.s32.totalorder %v226, 0
    %vm253 = vcmp.ne.s32.totalorder %v233, 0
    %vm254 = vcmp.ne.s32.totalorder %v240, 0
    %vm255 = vcmp.ne.s32.totalorder %v247, 0
    %vm256 = vcmp.lt.s32.totalorder %v198, 0
    %vm257 = vcmp.lt.s32.totalorder %v205, 0
    %vm258 = vcmp.lt.s32.totalorder %v212, 0
    %vm259 = vcmp.lt.s32.totalorder %v219, 0
    %vm260 = vcmp.lt.s32.totalorder %v226, 0
    %vm261 = vcmp.lt.s32.totalorder %v233, 0
    %vm262 = vcmp.lt.s32.totalorder %v240, 0
    %vm263 = vcmp.lt.s32.totalorder %v247, 0
    %vm264 = vmand %vm256, %vm248
    %vm265 = vmand %vm257, %vm249
    %vm266 = vmand %vm258, %vm250
    %vm267 = vmand %vm259, %vm251
    %vm268 = vmand %vm260, %vm252
    %vm269 = vmand %vm261, %vm253
    %vm270 = vmand %vm262, %vm254
    %vm271 = vmand %vm263, %vm255
    %v272 = vadd.s32 %v198, 16
    %v273 = vadd.s32 %v205, 16
    %v274 = vadd.s32 %v212, 16
    %v275 = vadd.s32 %v219, 16
    %v276 = vadd.s32 %v226, 16
    %v277 = vadd.s32 %v233, 16
    %v278 = vadd.s32 %v240, 16
    %v279 = vadd.s32 %v247, 16
    %v280 = vsel %vm264, %v272, %v198
    %v281 = vsel %vm265, %v273, %v205
    %v282 = vsel %vm266, %v274, %v212
    %v283 = vsel %vm267, %v275, %v219
    %v284 = vsel %vm268, %v276, %v226
    %v285 = vsel %vm269, %v277, %v233
    %v286 = vsel %vm270, %v278, %v240
    %v287 = vsel %vm271, %v279, %v247
    %vm288 = vcmp.ne.s32.totalorder %v280, 0
    %vm289 = vcmp.ne.s32.totalorder %v281, 0
    %vm290 = vcmp.ne.s32.totalorder %v282, 0
    %vm291 = vcmp.ne.s32.totalorder %v283, 0
    %vm292 = vcmp.ne.s32.totalorder %v284, 0
    %vm293 = vcmp.ne.s32.totalorder %v285, 0
    %vm294 = vcmp.ne.s32.totalorder %v286, 0
    %vm295 = vcmp.ne.s32.totalorder %v287, 0
    %v296 = vrot.slane %v167, 7
    %v297 = vrot.slane %v168, 7
    %v298 = vrot.slane %v169, 7
    %v299 = vrot.slane %v170, 7
    %v300 = vrot.slane %v171, 7
    %v301 = vrot.slane %v172, 7
    %v302 = vrot.slane %v173, 7
    %v303 = vrot.slane %v174, 7
    %vm304 = vcmp.lt.s32.totalorder %v184, 1
    %v305 = vsel %vm304, %v302, %v303
    %v306 = vsel %vm304, %v301, %v302
    %v307 = vsel %vm304, %v300, %v301
    %v308 = vsel %vm304, %v299, %v300
    %v309 = vsel %vm304, %v298, %v299
    %v310 = vsel %vm304, %v297, %v298
    %v311 = vsel %vm304, %v296, %v297
    %v312 = vsel %vm304, %v303, %v296
    %v313 = vsel %vm288, 1, 0
    %v314 = vsel %vm289, 1, 0
    %v315 = vsel %vm290, 1, 0
    %v316 = vsel %vm291, 1, 0
    %v317 = vsel %vm292, 1, 0
    %v318 = vsel %vm293, 1, 0
    %v319 = vsel %vm294, 1, 0
    %v320 = vsel %vm295, 1, 0
    %vm321 = vcmp.eq.s32.totalorder %v313, 1
    %vm322 = vcmp.eq.s32.totalorder %v314, 1
    %vm323 = vcmp.eq.s32.totalorder %v315, 1
    %vm324 = vcmp.eq.s32.totalorder %v316, 1
    %vm325 = vcmp.eq.s32.totalorder %v317, 1
    %vm326 = vcmp.eq.s32.totalorder %v318, 1
    %vm327 = vcmp.eq.s32.totalorder %v319, 1
    %vm328 = vcmp.eq.s32.totalorder %v320, 1
    %v329 = vsel %vm321, %v312, 0.0
    %v330 = vsel %vm322, %v311, 0.0
    %v331 = vsel %vm323, %v310, 0.0
    %v332 = vsel %vm324, %v309, 0.0
    %v333 = vsel %vm325, %v308, 0.0
    %v334 = vsel %vm326, %v307, 0.0
    %v335 = vsel %vm327, %v306, 0.0
    %v336 = vsel %vm328, %v305, 0.0
    %v337 = vpack.c.bf16 %v329, %v329
    %v338 = vpack.c.bf16 %v330, %v330
    %v339 = vpack.c.bf16 %v331, %v331
    %v340 = vpack.c.bf16 %v332, %v332
    %v341 = vpack.c.bf16 %v333, %v333
    %v342 = vpack.c.bf16 %v334, %v334
    %v343 = vpack.c.bf16 %v335, %v335
    %v344 = vpack.c.bf16 %v336, %v336
    %vm345 = vcmp.ne.s32.totalorder %v280, 15
    %vm346 = vcmp.ne.s32.totalorder %v281, 15
    %vm347 = vcmp.ne.s32.totalorder %v282, 15
    %vm348 = vcmp.ne.s32.totalorder %v283, 15
    %vm349 = vcmp.ne.s32.totalorder %v284, 15
    %vm350 = vcmp.ne.s32.totalorder %v285, 15
    %vm351 = vcmp.ne.s32.totalorder %v286, 15
    %vm352 = vcmp.ne.s32.totalorder %v287, 15
    %v353 = vrot.slane %v167, 1
    %v354 = vrot.slane %v168, 1
    %v355 = vrot.slane %v169, 1
    %v356 = vrot.slane %v170, 1
    %v357 = vrot.slane %v171, 1
    %v358 = vrot.slane %v172, 1
    %v359 = vrot.slane %v173, 1
    %v360 = vrot.slane %v174, 1
    %vm361 = vcmp.lt.s32.totalorder %v184, 7
    %v362 = vsel %vm361, %v359, %v360
    %v363 = vsel %vm361, %v358, %v359
    %v364 = vsel %vm361, %v357, %v358
    %v365 = vsel %vm361, %v356, %v357
    %v366 = vsel %vm361, %v355, %v356
    %v367 = vsel %vm361, %v354, %v355
    %v368 = vsel %vm361, %v353, %v354
    %v369 = vsel %vm361, %v360, %v353
    %v370 = vsel %vm345, 1, 0
    %v371 = vsel %vm346, 1, 0
    %v372 = vsel %vm347, 1, 0
    %v373 = vsel %vm348, 1, 0
    %v374 = vsel %vm349, 1, 0
    %v375 = vsel %vm350, 1, 0
    %v376 = vsel %vm351, 1, 0
    %v377 = vsel %vm352, 1, 0
    %vm378 = vcmp.eq.s32.totalorder %v370, 1
    %vm379 = vcmp.eq.s32.totalorder %v371, 1
    %vm380 = vcmp.eq.s32.totalorder %v372, 1
    %vm381 = vcmp.eq.s32.totalorder %v373, 1
    %vm382 = vcmp.eq.s32.totalorder %v374, 1
    %vm383 = vcmp.eq.s32.totalorder %v375, 1
    %vm384 = vcmp.eq.s32.totalorder %v376, 1
    %vm385 = vcmp.eq.s32.totalorder %v377, 1
    %v386 = vsel %vm378, %v368, 0.0
    %v387 = vsel %vm379, %v367, 0.0
    %v388 = vsel %vm380, %v366, 0.0
    %v389 = vsel %vm381, %v365, 0.0
    %v390 = vsel %vm382, %v364, 0.0
    %v391 = vsel %vm383, %v363, 0.0
    %v392 = vsel %vm384, %v362, 0.0
    %v393 = vsel %vm385, %v369, 0.0
    %v394 = vpack.c.bf16 %v386, %v386
    %v395 = vpack.c.bf16 %v387, %v387
    %v396 = vpack.c.bf16 %v388, %v388
    %v397 = vpack.c.bf16 %v389, %v389
    %v398 = vpack.c.bf16 %v390, %v390
    %v399 = vpack.c.bf16 %v391, %v391
    %v400 = vpack.c.bf16 %v392, %v392
    %v401 = vpack.c.bf16 %v393, %v393
    %v410 = vunpack.c.l.b16 %v337
    %v411 = vunpack.c.l.b16 %v338
    %v412 = vunpack.c.l.b16 %v339
    %v413 = vunpack.c.l.b16 %v340
    %v414 = vunpack.c.l.b16 %v341
    %v415 = vunpack.c.l.b16 %v342
    %v416 = vunpack.c.l.b16 %v343
    %v417 = vunpack.c.l.b16 %v344
    %v418 = vpack.c.b16 %v411, %v410
    %v419 = vpack.c.b16 %v413, %v412
    %v420 = vpack.c.b16 %v415, %v414
    %v421 = vpack.c.b16 %v417, %v416
    %v430 = vunpack.c.l.b16 %v175
    %v431 = vunpack.c.l.b16 %v176
    %v432 = vunpack.c.l.b16 %v177
    %v433 = vunpack.c.l.b16 %v178
    %v434 = vunpack.c.l.b16 %v179
    %v435 = vunpack.c.l.b16 %v180
    %v436 = vunpack.c.l.b16 %v181
    %v437 = vunpack.c.l.b16 %v182
    %v438 = vpack.c.b16 %v431, %v430
    %v439 = vpack.c.b16 %v433, %v432
    %v440 = vpack.c.b16 %v435, %v434
    %v441 = vpack.c.b16 %v437, %v436
    %442 = vrot.lane.b32.xlu0 %v438, 64
    %v443 = vpop.permute.xlu0 %442
    %444 = vrot.lane.b32.xlu0 %v439, 64
    %v445 = vpop.permute.xlu0 %444
    %446 = vrot.lane.b32.xlu0 %v440, 64
    %v447 = vpop.permute.xlu0 %446
    %448 = vrot.lane.b32.xlu0 %v441, 64
    %v449 = vpop.permute.xlu0 %448
    %v458 = vunpack.c.l.b16 %v394
    %v459 = vunpack.c.l.b16 %v395
    %v460 = vunpack.c.l.b16 %v396
    %v461 = vunpack.c.l.b16 %v397
    %v462 = vunpack.c.l.b16 %v398
    %v463 = vunpack.c.l.b16 %v399
    %v464 = vunpack.c.l.b16 %v400
    %v465 = vunpack.c.l.b16 %v401
    %v466 = vpack.c.b16 %v459, %v458
    %v467 = vpack.c.b16 %v461, %v460
    %v468 = vpack.c.b16 %v463, %v462
    %v469 = vpack.c.b16 %v465, %v464
    %vm470 = vcmask 523264
    %v473 = vsel %vm470, %v418, %v443
    %v477 = vsel %vm470, %v419, %v445
    %v481 = vsel %vm470, %v420, %v447
    %v485 = vsel %vm470, %v421, %v449
    %v487 = vld [vmem:[#allocation2] sm:$0xff]
    %v488 = vld [vmem:[#allocation2 + $0x8] sm:$0xff]
    %v489 = vld [vmem:[#allocation2 + $0x10] sm:$0xff]
    %v490 = vld [vmem:[#allocation2 + $0x18] sm:$0xff]
    %v491 = vld [vmem:[#allocation2 + $0x20] sm:$0xff]
    %v492 = vld [vmem:[#allocation2 + $0x28] sm:$0xff]
    %v493 = vld [vmem:[#allocation2 + $0x30] sm:$0xff]
    %v494 = vld [vmem:[#allocation2 + $0x38] sm:$0xff]
    %v495 = vld [vmem:[#allocation2 + $0x40] sm:$0xff]
    %v496 = vld [vmem:[#allocation2 + $0x48] sm:$0xff]
    %v497 = vld [vmem:[#allocation2 + $0x50] sm:$0xff]
    %v498 = vld [vmem:[#allocation2 + $0x58] sm:$0xff]
    %v499 = vld [vmem:[#allocation2 + $0x60] sm:$0xff]
    %v500 = vld [vmem:[#allocation2 + $0x68] sm:$0xff]
    %v501 = vld [vmem:[#allocation2 + $0x70] sm:$0xff]
    %v502 = vld [vmem:[#allocation2 + $0x78] sm:$0xff]
    %v503 = vld [vmem:[#allocation2 + $0x80] sm:$0xff]
    %v504 = vld [vmem:[#allocation2 + $0x88] sm:$0xff]
    %v505 = vld [vmem:[#allocation2 + $0x90] sm:$0xff]
    %v506 = vld [vmem:[#allocation2 + $0x98] sm:$0xff]
    %v507 = vld [vmem:[#allocation2 + $0xa0] sm:$0xff]
    %v508 = vld [vmem:[#allocation2 + $0xa8] sm:$0xff]
    %v509 = vld [vmem:[#allocation2 + $0xb0] sm:$0xff]
    %v510 = vld [vmem:[#allocation2 + $0xb8] sm:$0xff]
    %v511 = vld [vmem:[%s4] sm:$0x3]
    %v513 = vperm.slane %v511, 0
    %v514 = vperm.slane %v511, 1
    %v541 = vunpack.c.l.b16 %v487
    %v542 = vunpack.c.h.b16 %v487
    %v543 = vunpack.c.l.b16 %v488
    %v544 = vunpack.c.h.b16 %v488
    %v545 = vunpack.c.l.b16 %v489
    %v546 = vunpack.c.h.b16 %v489
    %v547 = vunpack.c.l.b16 %v490
    %v548 = vunpack.c.h.b16 %v490
    %v549 = vunpack.c.l.b16 %v491
    %v550 = vunpack.c.h.b16 %v491
    %v551 = vunpack.c.l.b16 %v492
    %v552 = vunpack.c.h.b16 %v492
    %v553 = vunpack.c.l.b16 %v493
    %v554 = vunpack.c.h.b16 %v493
    %v555 = vunpack.c.l.b16 %v494
    %v556 = vunpack.c.h.b16 %v494
    %v557 = vunpack.c.l.b16 %v495
    %v558 = vunpack.c.h.b16 %v495
    %v559 = vunpack.c.l.b16 %v496
    %v560 = vunpack.c.h.b16 %v496
    %v561 = vunpack.c.l.b16 %v497
    %v562 = vunpack.c.h.b16 %v497
    %v563 = vunpack.c.l.b16 %v498
    %v564 = vunpack.c.h.b16 %v498
    %v565 = vunpack.c.l.b16 %v499
    %v566 = vunpack.c.h.b16 %v499
    %v567 = vunpack.c.l.b16 %v500
    %v568 = vunpack.c.h.b16 %v500
    %v569 = vunpack.c.l.b16 %v501
    %v570 = vunpack.c.h.b16 %v501
    %v571 = vunpack.c.l.b16 %v502
    %v572 = vunpack.c.h.b16 %v502
    %v573 = vunpack.c.l.b16 %v503
    %v574 = vunpack.c.h.b16 %v503
    %v575 = vunpack.c.l.b16 %v504
    %v576 = vunpack.c.h.b16 %v504
    %v577 = vunpack.c.l.b16 %v505
    %v578 = vunpack.c.h.b16 %v505
    %v579 = vunpack.c.l.b16 %v506
    %v580 = vunpack.c.h.b16 %v506
    %v581 = vunpack.c.l.b16 %v507
    %v582 = vunpack.c.h.b16 %v507
    %v583 = vunpack.c.l.b16 %v508
    %v584 = vunpack.c.h.b16 %v508
    %v585 = vunpack.c.l.b16 %v509
    %v586 = vunpack.c.h.b16 %v509
    %v587 = vunpack.c.l.b16 %v510
    %v588 = vunpack.c.h.b16 %v510
    %v589 = vpack.c.b16 %v543, %v541
    %v590 = vpack.c.b16 %v544, %v542
    %v591 = vpack.c.b16 %v547, %v545
    %v592 = vpack.c.b16 %v548, %v546
    %v593 = vpack.c.b16 %v551, %v549
    %v594 = vpack.c.b16 %v552, %v550
    %v595 = vpack.c.b16 %v555, %v553
    %v596 = vpack.c.b16 %v556, %v554
    %v597 = vpack.c.b16 %v559, %v557
    %v598 = vpack.c.b16 %v560, %v558
    %v599 = vpack.c.b16 %v563, %v561
    %v600 = vpack.c.b16 %v564, %v562
    %v601 = vpack.c.b16 %v567, %v565
    %v602 = vpack.c.b16 %v568, %v566
    %v603 = vpack.c.b16 %v571, %v569
    %v604 = vpack.c.b16 %v572, %v570
    %v605 = vpack.c.b16 %v575, %v573
    %v606 = vpack.c.b16 %v576, %v574
    %v607 = vpack.c.b16 %v579, %v577
    %v608 = vpack.c.b16 %v580, %v578
    %v609 = vpack.c.b16 %v583, %v581
    %v610 = vpack.c.b16 %v584, %v582
    %v611 = vpack.c.b16 %v587, %v585
    %v612 = vpack.c.b16 %v588, %v586
    %v638 = vsel %vm470, %v466, 0
    %v641 = vsel %vm470, %v467, 0
    %v644 = vsel %vm470, %v468, 0
    %v647 = vsel %vm470, %v469, 0
    %649 = vmatpush.bf16.msra.mxu0 %v603
    %650 = vmatpush.bf16.msra.mxu0 %v601
    %651 = vmatpush.bf16.msra.mxu0 %v599
    %652 = vmatpush.bf16.msra.mxu0 %v597
    %653 = vmatpush.bf16.msra.mxu0 %v595
    %654 = vmatpush.bf16.msra.mxu0 %v593
    %655 = vmatpush.bf16.msra.mxu0 %v591
    %656 = vmatpush.bf16.msra.mxu0 %v589
    %657 = vmatmul.bf16.gmra.mxu0 %v473
    %v658 = vpop.f32.mrf.mxu0
    %v659 = vadd.f32 %v513, %v658
    %v660 = vpop.f32.mrf.mxu0
    %v661 = vadd.f32 %v513, %v660
    %662 = vmatmul.bf16.gmra.mxu0 %v477
    %v663 = vpop.f32.mrf.mxu0
    %v664 = vadd.f32 %v513, %v663
    %v665 = vpop.f32.mrf.mxu0
    %v666 = vadd.f32 %v513, %v665
    %667 = vmatmul.bf16.gmra.mxu0 %v481
    %v668 = vpop.f32.mrf.mxu0
    %v669 = vadd.f32 %v513, %v668
    %v670 = vpop.f32.mrf.mxu0
    %v671 = vadd.f32 %v513, %v670
    %672 = vmatmul.bf16.gmra.mxu0 %v485
    %v673 = vpop.f32.mrf.mxu0
    %v674 = vadd.f32 %v513, %v673
    %v675 = vpop.f32.mrf.mxu0
    %v676 = vadd.f32 %v513, %v675
    %677 = vdwg.mxu0
    %678 = vmatpush.bf16.msra.mxu0 0
    %679 = vmatpush.bf16.msra.mxu0 0
    %680 = vmatpush.bf16.msra.mxu0 0
    %681 = vmatpush.bf16.msra.mxu0 0
    %682 = vmatpush.bf16.msra.mxu0 %v611
    %683 = vmatpush.bf16.msra.mxu0 %v609
    %684 = vmatpush.bf16.msra.mxu0 %v607
    %685 = vmatpush.bf16.msra.mxu0 %v605
    %686 = vmatmul.bf16.gmra.mxu0 %v638
    %v687 = vpop.f32.mrf.mxu0
    %v688 = vadd.f32 %v659, %v687
    %v689 = vpop.f32.mrf.mxu0
    %v690 = vadd.f32 %v661, %v689
    %691 = vmatmul.bf16.gmra.mxu0 %v641
    %v692 = vpop.f32.mrf.mxu0
    %v693 = vadd.f32 %v664, %v692
    %v694 = vpop.f32.mrf.mxu0
    %v695 = vadd.f32 %v666, %v694
    %696 = vmatmul.bf16.gmra.mxu0 %v644
    %v697 = vpop.f32.mrf.mxu0
    %v698 = vadd.f32 %v669, %v697
    %v699 = vpop.f32.mrf.mxu0
    %v700 = vadd.f32 %v671, %v699
    %701 = vmatmul.bf16.gmra.mxu0 %v647
    %v702 = vpop.f32.mrf.mxu0
    %v703 = vadd.f32 %v674, %v702
    %v704 = vpop.f32.mrf.mxu0
    %v705 = vadd.f32 %v676, %v704
    %706 = vdwg.mxu0
    %707 = vmatpush.bf16.msra.mxu0 %v604
    %708 = vmatpush.bf16.msra.mxu0 %v602
    %709 = vmatpush.bf16.msra.mxu0 %v600
    %710 = vmatpush.bf16.msra.mxu0 %v598
    %711 = vmatpush.bf16.msra.mxu0 %v596
    %712 = vmatpush.bf16.msra.mxu0 %v594
    %713 = vmatpush.bf16.msra.mxu0 %v592
    %714 = vmatpush.bf16.msra.mxu0 %v590
    %715 = vmatmul.bf16.gmra.mxu0 %v473
    %v716 = vpop.f32.mrf.mxu0
    %v717 = vadd.f32 %v514, %v716
    %v718 = vpop.f32.mrf.mxu0
    %v719 = vadd.f32 %v514, %v718
    %720 = vmatmul.bf16.gmra.mxu0 %v477
    %v721 = vpop.f32.mrf.mxu0
    %v722 = vadd.f32 %v514, %v721
    %v723 = vpop.f32.mrf.mxu0
    %v724 = vadd.f32 %v514, %v723
    %725 = vmatmul.bf16.gmra.mxu0 %v481
    %v726 = vpop.f32.mrf.mxu0
    %v727 = vadd.f32 %v514, %v726
    %v728 = vpop.f32.mrf.mxu0
    %v729 = vadd.f32 %v514, %v728
    %730 = vmatmul.bf16.gmra.mxu0 %v485
    %v731 = vpop.f32.mrf.mxu0
    %v732 = vadd.f32 %v514, %v731
    %v733 = vpop.f32.mrf.mxu0
    %v734 = vadd.f32 %v514, %v733
    %735 = vdwg.mxu0
    %736 = vmatpush.bf16.msra.mxu0 0
    %737 = vmatpush.bf16.msra.mxu0 0
    %738 = vmatpush.bf16.msra.mxu0 0
    %739 = vmatpush.bf16.msra.mxu0 0
    %740 = vmatpush.bf16.msra.mxu0 %v612
    %741 = vmatpush.bf16.msra.mxu0 %v610
    %742 = vmatpush.bf16.msra.mxu0 %v608
    %743 = vmatpush.bf16.msra.mxu0 %v606
    %744 = vmatmul.bf16.gmra.mxu0 %v638
    %v745 = vpop.f32.mrf.mxu0
    %v746 = vadd.f32 %v717, %v745
    %v747 = vpop.f32.mrf.mxu0
    %v748 = vadd.f32 %v719, %v747
    %749 = vmatmul.bf16.gmra.mxu0 %v641
    %v750 = vpop.f32.mrf.mxu0
    %v751 = vadd.f32 %v722, %v750
    %v752 = vpop.f32.mrf.mxu0
    %v753 = vadd.f32 %v724, %v752
    %754 = vmatmul.bf16.gmra.mxu0 %v644
    %v755 = vpop.f32.mrf.mxu0
    %v756 = vadd.f32 %v727, %v755
    %v757 = vpop.f32.mrf.mxu0
    %v758 = vadd.f32 %v729, %v757
    %759 = vmatmul.bf16.gmra.mxu0 %v647
    %v760 = vpop.f32.mrf.mxu0
    %v761 = vadd.f32 %v732, %v760
    %v762 = vpop.f32.mrf.mxu0
    %v763 = vadd.f32 %v734, %v762
    %764 = vdwg.mxu0
    %v765 = vmax.f32 %v688, 0.0
    %v766 = vmax.f32 %v746, 0.0
    %v767 = vmax.f32 %v690, 0.0
    %v768 = vmax.f32 %v748, 0.0
    %v769 = vmax.f32 %v693, 0.0
    %v770 = vmax.f32 %v751, 0.0
    %v771 = vmax.f32 %v695, 0.0
    %v772 = vmax.f32 %v753, 0.0
    %v773 = vmax.f32 %v698, 0.0
    %v774 = vmax.f32 %v756, 0.0
    %v775 = vmax.f32 %v700, 0.0
    %v776 = vmax.f32 %v758, 0.0
    %v777 = vmax.f32 %v703, 0.0
    %v778 = vmax.f32 %v761, 0.0
    %v779 = vmax.f32 %v705, 0.0
    %v780 = vmax.f32 %v763, 0.0
    %781 = vst [vmem:[#allocation5] sm:$0xff] %v765
    %782 = vst [vmem:[#allocation5 + $0x8] sm:$0xff] %v766
    %783 = vst [vmem:[#allocation5 + $0x10] sm:$0xff] %v767
    %784 = vst [vmem:[#allocation5 + $0x18] sm:$0xff] %v768
    %785 = vst [vmem:[#allocation5 + $0x20] sm:$0xff] %v769
    %786 = vst [vmem:[#allocation5 + $0x28] sm:$0xff] %v770
    %787 = vst [vmem:[#allocation5 + $0x30] sm:$0xff] %v771
    %788 = vst [vmem:[#allocation5 + $0x38] sm:$0xff] %v772
    %789 = vst [vmem:[#allocation5 + $0x40] sm:$0xff] %v773
    %790 = vst [vmem:[#allocation5 + $0x48] sm:$0xff] %v774
    %791 = vst [vmem:[#allocation5 + $0x50] sm:$0xff] %v775
    %792 = vst [vmem:[#allocation5 + $0x58] sm:$0xff] %v776
    %793 = vst [vmem:[#allocation5 + $0x60] sm:$0xff] %v777
    %794 = vst [vmem:[#allocation5 + $0x68] sm:$0xff] %v778
    %795 = vst [vmem:[#allocation5 + $0x70] sm:$0xff] %v779
    %796 = vst [vmem:[#allocation5 + $0x78] sm:$0xff] %v780
    // Predicated region
    $region26: #{tpu_custom_call.1} parent=1 // pred_check
      _
    $region27: #{tpu_custom_call.1} parent=1 // pred_check_branch
      %798 = sbr.rel (0) target = $region29
    $region28: #{tpu_custom_call.1} parent=1 // pred_region
      %800 = vsyncadd [#allocation4], 0
      %s801 = sshll.u32 [#allocation5], 4
      %s802 = int_to_ptr.vmem [resolvable:$true] %s801
      %s803 = sshll.u32 %s5, 4
      %s804 = int_to_ptr.hbm [resolvable:$true] %s803
      %809 = dma.vmem_to_hbm [thread:$0]  %s802, 2048, %s804, [#allocation4], 256, 256, 16
    $region29: #{tpu_custom_call.1} parent=1 // pred_fallthru
      _
    // Predicated region
    $region30: #{tpu_custom_call.1} parent=1 // pred_check
      _
    $region31: #{tpu_custom_call.1} parent=1 // pred_check_branch
      %811 = sbr.rel (0) target = $region33
    $region32: #{tpu_custom_call.1} parent=1 // pred_region
      %813 = dma.done [#allocation4], 2048
    $region33: #{tpu_custom_call.1} parent=1 // pred_fallthru
      _
    %814 = vsyncpa [#allocation3], 1
    %815 = vsyncpa [#allocation4], 1

</llo_original>
